<compile_context>
chip_gen: v5e
topology: v5e:2x2
jax: 0.10.0
libtpu: 0.0.40
codegen_flags: <defaults>
</compile_context>

<pallas_src>
import functools

import jax
import jax.numpy as jnp
from jax.experimental import pallas as pl
from jax.experimental.pallas import tpu as pltpu


def _fused_conv_kernel(x_ref, w_ref, m_ref, o_ref, p_ref, *, shifts, cin, center):
    # x_ref: (BT, Cin, HW)   input block, lane axis = flattened H*W
    # w_ref: (Cout, K)       fused (conv2 . conv1) weight, K = 9*Cin + 1 (bias column)
    # m_ref: (9, 1, HW)      border-validity masks (f32 0/1), one per tap
    # o_ref: (BT, Cout, HW)  output block (lane-dense stores)
    # p_ref: (BT, K, HW)     reused im2col scratch in VMEM
    bt, _, hw = x_ref.shape
    cout, k = w_ref.shape

    x = x_ref[...]                                    # load block once
    for t, s in enumerate(shifts):                    # static 9-tap unroll (not batch)
        if t == center:                               # shift 0, mask all-ones: skip both
            tap = x
        else:
            # one XLU lane-rotation + one VPU mask-mul for the WHOLE batch tile
            tap = pltpu.roll(x, shift=s, axis=2) * m_ref[t]
        p_ref[:, t * cin:(t + 1) * cin, :] = tap      # store immediately (short live range)

    # ones row feeding the folded-bias column of w_ref (rewritten each step: scratch is
    # per-core and not guaranteed initialized on every core under "parallel" sharding)
    p_ref[:, len(shifts) * cin:, :] = jnp.ones((bt, 1, hw), jnp.float32)

    # Single batched MXU contraction over K for the whole batch tile.
    w = jnp.broadcast_to(w_ref[...], (bt, cout, k))
    y = jnp.einsum("bpk,bkl->bpl", w, p_ref[...],
                   preferred_element_type=jnp.float32)      # (BT, Cout, HW)
    o_ref[...] = y.astype(o_ref.dtype)


def _tpu_plan():
    """Per-generation tiling knobs (conservative defaults if the chip is unknown)."""
    try:
        kind = jax.devices()[0].device_kind.lower()
    except Exception:
        kind = ""
    single_tc = any(tag in kind for tag in ("v5e", "v5 lite", "v6e", "v6 lite"))
    if single_tc:
        # one TensorCore, 128 MiB physical VMEM: fewer, bigger grid steps are free wins
        return dict(keep_two_steps=False, budget=48 << 20, vmem_limit=64 << 20)
    # v7x (dual TC, 64 MiB VMEM per core) or unknown: keep >=2 parallel steps, tighter budget
    return dict(keep_two_steps=True, budget=20 << 20, vmem_limit=32 << 20)


def _pick_batch_tile(n, cin, cout, hw, *, budget_bytes, keep_two_steps):
    """Largest batch tile whose working set (I/O blocks + im2col scratch) fits the budget."""
    def pad(a, m):
        return -(-a // m) * m
    hwp = pad(hw, 128)
    k = 9 * cin + 1
    # double-buffered input/output blocks + the single reused im2col scratch, all f32
    per_b = 4 * (2 * pad(cin, 8) * hwp + 2 * pad(cout, 8) * hwp + pad(k, 8) * hwp)
    fixed = 4 * (pad(cout, 8) * pad(k, 128) + pad(9, 8) * hwp)   # weight + masks (tiny)
    best = 1
    for bt in range(1, n + 1):
        if n % bt:
            continue
        if keep_two_steps and n >= 2 and n // bt < 2:
            continue                      # leave >=2 parallel grid steps for dual-TC chips
        if fixed + bt * per_b > budget_bytes:
            continue
        best = bt
    return best


def two_conv_decoder(x_nchw, w1_oihw, b1, w2_oihw, b2, *, batch_tile=None):
    """Forward pass of TwoConvDecoder: Conv2d(3x3, pad=1) -> Conv2d(1x1).

    x_nchw : (N, Cin, H, W)    float32
    w1_oihw: (Cin, Cin, 3, 3)  conv1 weight (PyTorch OIHW)
    b1     : (Cin,)
    w2_oihw: (Cout, Cin, 1, 1) conv2 weight (PyTorch OIHW)
    b2     : (Cout,)
    returns: (N, Cout, H, W)
    """
    N, Cin, H, W = x_nchw.shape
    Cout = w2_oihw.shape[0]
    HW = H * W
    K = 9 * Cin + 1

    # --- fold conv2 (1x1) into conv1 (exact: purely linear composition) ---
    w2m = w2_oihw[:, :, 0, 0]                                   # (Cout, Cin)
    w_eff = jnp.einsum("po,oikl->pikl", w2m, w1_oihw)           # (Cout, Cin, 3, 3)
    # tap-major K layout: column block t = kh*3 + kw holds w_eff[:, :, kh, kw]
    w_taps = jnp.transpose(w_eff, (0, 2, 3, 1)).reshape(Cout, 9 * Cin)
    b_eff = (w2m @ b1 + b2).reshape(Cout, 1)
    w_stack = jnp.concatenate([w_taps, b_eff], axis=1)          # (Cout, K), bias folded

    # --- free-view layout: NCHW -> (N, C, H*W); no pad / transpose in HBM ---
    x_flat = x_nchw.reshape(N, Cin, HW)

    # static lane shifts + border masks for the 9 taps (tap order = kh, kw)
    pos = jnp.arange(HW, dtype=jnp.int32)
    hh, ww = pos // W, pos % W
    shifts, masks = [], []
    for kh in range(3):
        for kw in range(3):
            dh, dw = kh - 1, kw - 1
            shifts.append((-(dh * W + dw)) % HW)
            ok = ((hh + dh >= 0) & (hh + dh < H) &
                  (ww + dw >= 0) & (ww + dw < W))
            masks.append(ok)
    mask_arr = jnp.stack(masks).astype(jnp.float32).reshape(9, 1, HW)
    center = 4   # kh = 1, kw = 1 -> shift 0, mask all-ones

    plan = _tpu_plan()
    bt = batch_tile or _pick_batch_tile(
        N, Cin, Cout, HW,
        budget_bytes=plan["budget"], keep_two_steps=plan["keep_two_steps"])
    assert N % bt == 0, "batch must be divisible by the batch tile"
    grid = (N // bt,)

    kernel = functools.partial(_fused_conv_kernel, shifts=tuple(shifts),
                               cin=Cin, center=center)

    cost = pl.CostEstimate(
        flops=2 * N * HW * K * Cout,
        transcendentals=0,
        bytes_accessed=4 * (x_flat.size + N * Cout * HW
                            + w_stack.size + mask_arr.size),
    )

    out_flat = pl.pallas_call(
        kernel,
        out_shape=jax.ShapeDtypeStruct((N, Cout, HW), x_nchw.dtype),
        grid=grid,
        in_specs=[
            pl.BlockSpec((bt, Cin, HW), lambda n: (n, 0, 0)),
            pl.BlockSpec((Cout, K), lambda n: (0, 0)),
            pl.BlockSpec((9, 1, HW), lambda n: (0, 0, 0)),
        ],
        out_specs=pl.BlockSpec((bt, Cout, HW), lambda n: (n, 0, 0)),
        scratch_shapes=[pltpu.VMEM((bt, K, HW), jnp.float32)],
        compiler_params=pltpu.CompilerParams(
            dimension_semantics=("parallel",),
            vmem_limit_bytes=plan["vmem_limit"],
        ),
        cost_estimate=cost,
    )(x_flat, w_stack, mask_arr)

    # (N, Cout, H*W) -> (N, Cout, H, W) is a free view: output is already NCHW.
    return out_flat.reshape(N, Cout, H, W)


def _reference(x_nchw, w1_oihw, b1, w2_oihw, b2):
    """Pure-JAX reference matching PyTorch Conv2d semantics (NCHW)."""
    dn = ("NCHW", "OIHW", "NCHW")
    y = jax.lax.conv_general_dilated(
        x_nchw, w1_oihw, window_strides=(1, 1), padding=((1, 1), (1, 1)),
        dimension_numbers=dn,
    ) + b1.reshape(1, -1, 1, 1)
    z = jax.lax.conv_general_dilated(
        y, w2_oihw, window_strides=(1, 1), padding=((0, 0), (0, 0)),
        dimension_numbers=dn,
    ) + b2.reshape(1, -1, 1, 1)
    return z


if __name__ == "__main__":
    # Small synthetic config: batch=2, in_channels=8, out_channels=4, 16x16.
    N, Cin, Cout, H, W = 2, 8, 4, 16, 16

    key = jax.random.PRNGKey(0)
    kx, kw1, kb1, kw2, kb2 = jax.random.split(key, 5)

    bound1 = 1.0 / (Cin * 3 * 3) ** 0.5
    bound2 = 1.0 / (Cin * 1 * 1) ** 0.5
    x = jax.random.normal(kx, (N, Cin, H, W), jnp.float32)
    w1 = jax.random.uniform(kw1, (Cin, Cin, 3, 3), jnp.float32, -bound1, bound1)
    b1 = jax.random.uniform(kb1, (Cin,), jnp.float32, -bound1, bound1)
    w2 = jax.random.uniform(kw2, (Cout, Cin, 1, 1), jnp.float32, -bound2, bound2)
    b2 = jax.random.uniform(kb2, (Cout,), jnp.float32, -bound2, bound2)

    out = jax.block_until_ready(two_conv_decoder(x, w1, b1, w2, b2))
    ref = jax.block_until_ready(_reference(x, w1, b1, w2, b2))

    assert out.shape == (N, Cout, H, W)
    assert jnp.allclose(out, ref, rtol=1e-4, atol=1e-4), "mismatch vs reference"

    print("KERNEL_OK")
</pallas_src>

<mosaic_0001>
module attributes {stable_mosaic.version = 11 : i64} {
  func.func @_fused_conv_kernel(%arg0: i32, %arg1: memref<1x8x256xf32, #tpu.memory_space<vmem>>, %arg2: memref<4x73xf32, #tpu.memory_space<vmem>>, %arg3: memref<9x1x256xf32, #tpu.memory_space<vmem>>, %arg4: memref<1x4x256xf32, #tpu.memory_space<vmem>>, %arg5: memref<1x73x256xf32, #tpu.memory_space<vmem>>) attributes {dimension_semantics = [#tpu.dimension_semantics<parallel>], iteration_bounds = array<i64: 2>, scalar_prefetch = 0 : i64, scratch_operands = 1 : i64, tpu.core_type = #tpu.core_type<tc>, window_params = [{transform_indices = @transform_0, window_bounds = array<i64: 1, 8, 256>}, {pipeline_mode = #tpu.pipeline_mode<synchronous>, transform_indices = @transform_1, window_bounds = array<i64: 4, 73>}, {pipeline_mode = #tpu.pipeline_mode<synchronous>, transform_indices = @transform_2, window_bounds = array<i64: 9, 1, 256>}, {transform_indices = @transform_3, window_bounds = array<i64: 1, 4, 256>}]} {
    %c0 = arith.constant 0 : index
    %c0_0 = arith.constant 0 : index
    %c0_1 = arith.constant 0 : index
    %0 = vector.load %arg1[%c0, %c0_0, %c0_1] : memref<1x8x256xf32, #tpu.memory_space<vmem>>, vector<1x8x256xf32>
    %c17_i32 = arith.constant 17 : i32
    %1 = tpu.dynamic_rotate %0 by %c17_i32 dim 2 : vector<1x8x256xf32>, i32 -> vector<1x8x256xf32>
    %c0_2 = arith.constant 0 : index
    %c0_3 = arith.constant 0 : index
    %c0_4 = arith.constant 0 : index
    %2 = vector.load %arg3[%c0_2, %c0_3, %c0_4] : memref<9x1x256xf32, #tpu.memory_space<vmem>>, vector<1x1x256xf32>
    %3 = vector.shape_cast %2 : vector<1x1x256xf32> to vector<1x256xf32>
    %4 = vector.shape_cast %3 : vector<1x256xf32> to vector<1x1x256xf32>
    %5 = vector.broadcast %4 : vector<1x1x256xf32> to vector<1x8x256xf32>
    %6 = arith.mulf %1, %5 : vector<1x8x256xf32>
    %c0_5 = arith.constant 0 : index
    %c0_6 = arith.constant 0 : index
    %c0_7 = arith.constant 0 : index
    %7 = vector.load %arg5[%c0_5, %c0_6, %c0_7] : memref<1x73x256xf32, #tpu.memory_space<vmem>>, vector<1x8x256xf32>
    tpu.vector_store %arg5[%c0_5, %c0_6, %c0_7], %6 {strides = array<i32>} : memref<1x73x256xf32, #tpu.memory_space<vmem>>, vector<1x8x256xf32>,
    %c16_i32 = arith.constant 16 : i32
    %8 = tpu.dynamic_rotate %0 by %c16_i32 dim 2 : vector<1x8x256xf32>, i32 -> vector<1x8x256xf32>
    %c1 = arith.constant 1 : index
    %c0_8 = arith.constant 0 : index
    %c0_9 = arith.constant 0 : index
    %9 = vector.load %arg3[%c1, %c0_8, %c0_9] : memref<9x1x256xf32, #tpu.memory_space<vmem>>, vector<1x1x256xf32>
    %10 = vector.shape_cast %9 : vector<1x1x256xf32> to vector<1x256xf32>
    %11 = vector.shape_cast %10 : vector<1x256xf32> to vector<1x1x256xf32>
    %12 = vector.broadcast %11 : vector<1x1x256xf32> to vector<1x8x256xf32>
    %13 = arith.mulf %8, %12 : vector<1x8x256xf32>
    %c0_10 = arith.constant 0 : index
    %c8 = arith.constant 8 : index
    %c0_11 = arith.constant 0 : index
    %14 = vector.load %arg5[%c0_10, %c8, %c0_11] : memref<1x73x256xf32, #tpu.memory_space<vmem>>, vector<1x8x256xf32>
    tpu.vector_store %arg5[%c0_10, %c8, %c0_11], %13 {strides = array<i32>} : memref<1x73x256xf32, #tpu.memory_space<vmem>>, vector<1x8x256xf32>,
    %c15_i32 = arith.constant 15 : i32
    %15 = tpu.dynamic_rotate %0 by %c15_i32 dim 2 : vector<1x8x256xf32>, i32 -> vector<1x8x256xf32>
    %c2 = arith.constant 2 : index
    %c0_12 = arith.constant 0 : index
    %c0_13 = arith.constant 0 : index
    %16 = vector.load %arg3[%c2, %c0_12, %c0_13] : memref<9x1x256xf32, #tpu.memory_space<vmem>>, vector<1x1x256xf32>
    %17 = vector.shape_cast %16 : vector<1x1x256xf32> to vector<1x256xf32>
    %18 = vector.shape_cast %17 : vector<1x256xf32> to vector<1x1x256xf32>
    %19 = vector.broadcast %18 : vector<1x1x256xf32> to vector<1x8x256xf32>
    %20 = arith.mulf %15, %19 : vector<1x8x256xf32>
    %c0_14 = arith.constant 0 : index
    %c16 = arith.constant 16 : index
    %c0_15 = arith.constant 0 : index
    %21 = vector.load %arg5[%c0_14, %c16, %c0_15] : memref<1x73x256xf32, #tpu.memory_space<vmem>>, vector<1x8x256xf32>
    tpu.vector_store %arg5[%c0_14, %c16, %c0_15], %20 {strides = array<i32>} : memref<1x73x256xf32, #tpu.memory_space<vmem>>, vector<1x8x256xf32>,
    %c1_i32 = arith.constant 1 : i32
    %22 = tpu.dynamic_rotate %0 by %c1_i32 dim 2 : vector<1x8x256xf32>, i32 -> vector<1x8x256xf32>
    %c3 = arith.constant 3 : index
    %c0_16 = arith.constant 0 : index
    %c0_17 = arith.constant 0 : index
    %23 = vector.load %arg3[%c3, %c0_16, %c0_17] : memref<9x1x256xf32, #tpu.memory_space<vmem>>, vector<1x1x256xf32>
    %24 = vector.shape_cast %23 : vector<1x1x256xf32> to vector<1x256xf32>
    %25 = vector.shape_cast %24 : vector<1x256xf32> to vector<1x1x256xf32>
    %26 = vector.broadcast %25 : vector<1x1x256xf32> to vector<1x8x256xf32>
    %27 = arith.mulf %22, %26 : vector<1x8x256xf32>
    %c0_18 = arith.constant 0 : index
    %c24 = arith.constant 24 : index
    %c0_19 = arith.constant 0 : index
    %28 = vector.load %arg5[%c0_18, %c24, %c0_19] : memref<1x73x256xf32, #tpu.memory_space<vmem>>, vector<1x8x256xf32>
    tpu.vector_store %arg5[%c0_18, %c24, %c0_19], %27 {strides = array<i32>} : memref<1x73x256xf32, #tpu.memory_space<vmem>>, vector<1x8x256xf32>,
    %c0_20 = arith.constant 0 : index
    %c32 = arith.constant 32 : index
    %c0_21 = arith.constant 0 : index
    %29 = vector.load %arg5[%c0_20, %c32, %c0_21] : memref<1x73x256xf32, #tpu.memory_space<vmem>>, vector<1x8x256xf32>
    tpu.vector_store %arg5[%c0_20, %c32, %c0_21], %0 {strides = array<i32>} : memref<1x73x256xf32, #tpu.memory_space<vmem>>, vector<1x8x256xf32>,
    %c255_i32 = arith.constant 255 : i32
    %30 = tpu.dynamic_rotate %0 by %c255_i32 dim 2 : vector<1x8x256xf32>, i32 -> vector<1x8x256xf32>
    %c5 = arith.constant 5 : index
    %c0_22 = arith.constant 0 : index
    %c0_23 = arith.constant 0 : index
    %31 = vector.load %arg3[%c5, %c0_22, %c0_23] : memref<9x1x256xf32, #tpu.memory_space<vmem>>, vector<1x1x256xf32>
    %32 = vector.shape_cast %31 : vector<1x1x256xf32> to vector<1x256xf32>
    %33 = vector.shape_cast %32 : vector<1x256xf32> to vector<1x1x256xf32>
    %34 = vector.broadcast %33 : vector<1x1x256xf32> to vector<1x8x256xf32>
    %35 = arith.mulf %30, %34 : vector<1x8x256xf32>
    %c0_24 = arith.constant 0 : index
    %c40 = arith.constant 40 : index
    %c0_25 = arith.constant 0 : index
    %36 = vector.load %arg5[%c0_24, %c40, %c0_25] : memref<1x73x256xf32, #tpu.memory_space<vmem>>, vector<1x8x256xf32>
    tpu.vector_store %arg5[%c0_24, %c40, %c0_25], %35 {strides = array<i32>} : memref<1x73x256xf32, #tpu.memory_space<vmem>>, vector<1x8x256xf32>,
    %c241_i32 = arith.constant 241 : i32
    %37 = tpu.dynamic_rotate %0 by %c241_i32 dim 2 : vector<1x8x256xf32>, i32 -> vector<1x8x256xf32>
    %c6 = arith.constant 6 : index
    %c0_26 = arith.constant 0 : index
    %c0_27 = arith.constant 0 : index
    %38 = vector.load %arg3[%c6, %c0_26, %c0_27] : memref<9x1x256xf32, #tpu.memory_space<vmem>>, vector<1x1x256xf32>
    %39 = vector.shape_cast %38 : vector<1x1x256xf32> to vector<1x256xf32>
    %40 = vector.shape_cast %39 : vector<1x256xf32> to vector<1x1x256xf32>
    %41 = vector.broadcast %40 : vector<1x1x256xf32> to vector<1x8x256xf32>
    %42 = arith.mulf %37, %41 : vector<1x8x256xf32>
    %c0_28 = arith.constant 0 : index
    %c48 = arith.constant 48 : index
    %c0_29 = arith.constant 0 : index
    %43 = vector.load %arg5[%c0_28, %c48, %c0_29] : memref<1x73x256xf32, #tpu.memory_space<vmem>>, vector<1x8x256xf32>
    tpu.vector_store %arg5[%c0_28, %c48, %c0_29], %42 {strides = array<i32>} : memref<1x73x256xf32, #tpu.memory_space<vmem>>, vector<1x8x256xf32>,
    %c240_i32 = arith.constant 240 : i32
    %44 = tpu.dynamic_rotate %0 by %c240_i32 dim 2 : vector<1x8x256xf32>, i32 -> vector<1x8x256xf32>
    %c7 = arith.constant 7 : index
    %c0_30 = arith.constant 0 : index
    %c0_31 = arith.constant 0 : index
    %45 = vector.load %arg3[%c7, %c0_30, %c0_31] : memref<9x1x256xf32, #tpu.memory_space<vmem>>, vector<1x1x256xf32>
    %46 = vector.shape_cast %45 : vector<1x1x256xf32> to vector<1x256xf32>
    %47 = vector.shape_cast %46 : vector<1x256xf32> to vector<1x1x256xf32>
    %48 = vector.broadcast %47 : vector<1x1x256xf32> to vector<1x8x256xf32>
    %49 = arith.mulf %44, %48 : vector<1x8x256xf32>
    %c0_32 = arith.constant 0 : index
    %c56 = arith.constant 56 : index
    %c0_33 = arith.constant 0 : index
    %50 = vector.load %arg5[%c0_32, %c56, %c0_33] : memref<1x73x256xf32, #tpu.memory_space<vmem>>, vector<1x8x256xf32>
    tpu.vector_store %arg5[%c0_32, %c56, %c0_33], %49 {strides = array<i32>} : memref<1x73x256xf32, #tpu.memory_space<vmem>>, vector<1x8x256xf32>,
    %c239_i32 = arith.constant 239 : i32
    %51 = tpu.dynamic_rotate %0 by %c239_i32 dim 2 : vector<1x8x256xf32>, i32 -> vector<1x8x256xf32>
    %c8_34 = arith.constant 8 : index
    %c0_35 = arith.constant 0 : index
    %c0_36 = arith.constant 0 : index
    %52 = vector.load %arg3[%c8_34, %c0_35, %c0_36] : memref<9x1x256xf32, #tpu.memory_space<vmem>>, vector<1x1x256xf32>
    %53 = vector.shape_cast %52 : vector<1x1x256xf32> to vector<1x256xf32>
    %54 = vector.shape_cast %53 : vector<1x256xf32> to vector<1x1x256xf32>
    %55 = vector.broadcast %54 : vector<1x1x256xf32> to vector<1x8x256xf32>
    %56 = arith.mulf %51, %55 : vector<1x8x256xf32>
    %c0_37 = arith.constant 0 : index
    %c64 = arith.constant 64 : index
    %c0_38 = arith.constant 0 : index
    %57 = vector.load %arg5[%c0_37, %c64, %c0_38] : memref<1x73x256xf32, #tpu.memory_space<vmem>>, vector<1x8x256xf32>
    tpu.vector_store %arg5[%c0_37, %c64, %c0_38], %56 {strides = array<i32>} : memref<1x73x256xf32, #tpu.memory_space<vmem>>, vector<1x8x256xf32>,
    %cst = arith.constant 1.000000e+00 : f32
    %58 = vector.broadcast %cst : f32 to vector<1x1x256xf32>
    %c0_39 = arith.constant 0 : index
    %c72 = arith.constant 72 : index
    %c0_40 = arith.constant 0 : index
    %59 = vector.load %arg5[%c0_39, %c72, %c0_40] : memref<1x73x256xf32, #tpu.memory_space<vmem>>, vector<1x1x256xf32>
    tpu.vector_store %arg5[%c0_39, %c72, %c0_40], %58 {strides = array<i32>} : memref<1x73x256xf32, #tpu.memory_space<vmem>>, vector<1x1x256xf32>,
    %c0_41 = arith.constant 0 : index
    %c0_42 = arith.constant 0 : index
    %60 = vector.load %arg2[%c0_41, %c0_42] : memref<4x73xf32, #tpu.memory_space<vmem>>, vector<4x73xf32>
    %61 = vector.shape_cast %60 : vector<4x73xf32> to vector<1x4x73xf32>
    %c0_43 = arith.constant 0 : index
    %c0_44 = arith.constant 0 : index
    %c0_45 = arith.constant 0 : index
    %62 = vector.load %arg5[%c0_43, %c0_44, %c0_45] : memref<1x73x256xf32, #tpu.memory_space<vmem>>, vector<1x73x256xf32>
    "tpu.trace_start"() <{level = 10 : i32, message = "bpk,bkl->bpl"}> : () -> ()
    %cst_46 = arith.constant dense<0.000000e+00> : vector<1x4x256xf32>
    %63 = tpu.matmul %61, %62, %cst_46 {dimension_numbers = #tpu.dot_dimension_numbers<[2], [1], [1], [2], [0, 0, 0, 1, 1, 2], [0], [0]>} : vector<1x4x73xf32>, vector<1x73x256xf32>, vector<1x4x256xf32> -> vector<1x4x256xf32>
    "tpu.trace_stop"() : () -> ()
    %c0_47 = arith.constant 0 : index
    %c0_48 = arith.constant 0 : index
    %c0_49 = arith.constant 0 : index
    %64 = vector.load %arg4[%c0_47, %c0_48, %c0_49] : memref<1x4x256xf32, #tpu.memory_space<vmem>>, vector<1x4x256xf32>
    tpu.vector_store %arg4[%c0_47, %c0_48, %c0_49], %63 {strides = array<i32>} : memref<1x4x256xf32, #tpu.memory_space<vmem>>, vector<1x4x256xf32>,
    return
  }
  func.func @transform_0(%arg0: i32) -> (i32, i32, i32) {
    %c0_i32 = arith.constant 0 : i32
    %c0_i32_0 = arith.constant 0 : i32
    %c0_i32_1 = arith.constant 0 : i32
    return %arg0, %c0_i32, %c0_i32_0 : i32, i32, i32
  }
  func.func @transform_1(%arg0: i32) -> (i32, i32) {
    %c0_i32 = arith.constant 0 : i32
    %c0_i32_0 = arith.constant 0 : i32
    %c0_i32_1 = arith.constant 0 : i32
    return %c0_i32, %c0_i32_0 : i32, i32
  }
  func.func @transform_2(%arg0: i32) -> (i32, i32, i32) {
    %c0_i32 = arith.constant 0 : i32
    %c0_i32_0 = arith.constant 0 : i32
    %c0_i32_1 = arith.constant 0 : i32
    %c0_i32_2 = arith.constant 0 : i32
    return %c0_i32, %c0_i32_0, %c0_i32_1 : i32, i32, i32
  }
  func.func @transform_3(%arg0: i32) -> (i32, i32, i32) {
    %c0_i32 = arith.constant 0 : i32
    %c0_i32_0 = arith.constant 0 : i32
    %c0_i32_1 = arith.constant 0 : i32
    return %arg0, %c0_i32, %c0_i32_0 : i32, i32, i32
  }
}

</mosaic_0001>

<llo_original>
// kernel: tpu_custom_call.1
$region0: #{tpu_custom_call.1}
  #allocation0 [shape = 'u32[]', space=smem, size = 0x4, offset = 0x4, fixed_abs, tag = 'smem constant byte address 0x4 - core index']
  #allocation1 [shape = 'u32[72,128]{1,0:T(1,128)}', space=vmem, size = 0x9000, scoped, tag = 'internal scratch']
  #allocation2 [shape = 'f32[1,73,256]{2,1,0:T(8,128)}', space=vmem, size = 0x14000, scoped, tag = 'scratch operand']
  %s0 = inlined_call_operand.hbm [shape: f32[2,8,256], index: 0, kind: input, shape index: {}]
  %s1 = inlined_call_operand.hbm [shape: f32[4,73], index: 1, kind: input, shape index: {}]
  %s2 = inlined_call_operand.hbm [shape: f32[9,1,256], index: 2, kind: input, shape index: {}]
  %s3 = inlined_call_operand.hbm [shape: f32[2,4,256], index: 3, kind: output, shape index: {}]
  %s4 = sld [smem:[#allocation0]]
  $region57: #{tpu_custom_call.1} parent=0
    _
  %s6 = ssub.s32 1, %s4
  %s7 = scalar_select 0, %s6, %s4
  $region1: #{tpu_custom_call.1} parent=0
    #allocation3 [shape = 'u8[16384]{0}', space=vmem, size = 0x4000, scoped, tag = 'input window, operand 0']
    #allocation4 [shape = 's32[2]{0}', space=sflag, size = 0x8, scoped, tag = 'scoped memory for tpu_custom_call.1']
    #allocation5 [shape = 's32[2]{0}', space=sflag, size = 0x8, scoped, tag = 'scoped memory for tpu_custom_call.1']
    #allocation6 [shape = 'u8[2048]{0}', space=vmem, size = 0x800, scoped, tag = 'input window, operand 1, single buffered']
    #allocation7 [shape = 's32[1]{0}', space=sflag, size = 0x4, scoped, tag = 'scoped memory for tpu_custom_call.1']
    #allocation8 [shape = 'u8[9216]{0}', space=vmem, size = 0x2400, scoped, tag = 'input window, operand 2, single buffered']
    #allocation9 [shape = 'u8[8192]{0}', space=vmem, size = 0x2000, scoped, tag = 'output window, operand 0']
    %8 = vsyncpa [#allocation4], 0
    %s9 = scalar_lea.sflag [#allocation4], 1
    %10 = vsyncpa %s9, 0
    %11 = vsyncpa [#allocation7], 0
    %12 = vsyncpa [#allocation5], 0
    %s13 = scalar_lea.sflag [#allocation5], 1
    %14 = vsyncpa %s13, 0
    loop: start=0, step=1, limit=4
    $region2: #{tpu_custom_call.1} parent=1 // loop_pre_header
      _
    $region3: #{tpu_custom_call.1} parent=1 // loop_header
      %s16 = sphi 0, %s20
      %p17 = scmp.ge.s32.totalorder %s16, 4
      %s26 = sphi 0, %s28
      %s29 = sphi 0, %s26
      %s30 = sphi 0, %s29
      %s46 = sphi 0, %s30
      %s50 = sphi 0, %s50
      %s52 = sphi 0, %s50
      %s53 = sphi 0, %s52
      %s67 = sphi 0, %s53
      %s71 = sphi 0, %s71
      %s73 = sphi 0, %s71
      %s74 = sphi 0, %s73
      %s88 = sphi 0, %s74
      %s94 = sphi 0, %s96
      %s97 = sphi 0, %s94
      %s98 = sphi 0, %s97
      %s114 = sphi 0, %s98
    $region4: #{tpu_custom_call.1} parent=1 // loop_header_branch
      %19 = sbr.rel (%p17) target = $region8
    $region5: #{tpu_custom_call.1} parent=1 // loop_body
      %s21 = ssub.s32 %s16, 1
      %s22 = ssub.s32 %s16, 2
      %s23 = sadd.s32 %s16, 1
      %s24 = ssub.s32 %s16, %s23
      %p25 = scmp.eq.s32.totalorder %s24, 0
      %s27 = sadd.s32 %s26, 1
      %s28 = scalar_select %p25, %s26, %s27
      %p31 = pneg %p25
      %p32 = scmp.eq.s32.totalorder %s16, 1
      %p33 = por %p31, %p32
      %p34 = scmp.ne.s32.totalorder %s26, %s29
      %p35 = scmp.eq.s32.totalorder %s16, 0
      %p36 = por %p34, %p35
      %p37 = scmp.ne.s32.totalorder %s26, %s29
      %p38 = scmp.eq.s32.totalorder %s21, 1
      %p39 = por %p37, %p38
      %p40 = scmp.ne.s32.totalorder %s29, %s30
      %p41 = scmp.eq.s32.totalorder %s21, 0
      %p42 = por %p40, %p41
      %p43 = scmp.ne.s32.totalorder %s29, %s30
      %p44 = scmp.eq.s32.totalorder %s22, 1
      %p45 = por %p43, %p44
      %p47 = scmp.ne.s32.totalorder %s30, %s46
      %p48 = scmp.eq.s32.totalorder %s22, 0
      %p49 = por %p47, %p48
      %s51 = sadd.s32 %s50, 1
      %p54 = scmp.eq.s32.totalorder %s16, 1
      %p55 = scmp.ne.s32.totalorder %s50, %s52
      %p56 = scmp.eq.s32.totalorder %s16, 0
      %p57 = por %p55, %p56
      %p58 = scmp.ne.s32.totalorder %s50, %s52
      %p59 = scmp.eq.s32.totalorder %s21, 1
      %p60 = por %p58, %p59
      %p61 = scmp.ne.s32.totalorder %s52, %s53
      %p62 = scmp.eq.s32.totalorder %s21, 0
      %p63 = por %p61, %p62
      %p64 = scmp.ne.s32.totalorder %s52, %s53
      %p65 = scmp.eq.s32.totalorder %s22, 1
      %p66 = por %p64, %p65
      %p68 = scmp.ne.s32.totalorder %s53, %s67
      %p69 = scmp.eq.s32.totalorder %s22, 0
      %p70 = por %p68, %p69
      %s72 = sadd.s32 %s71, 1
      %p75 = scmp.eq.s32.totalorder %s16, 1
      %p76 = scmp.ne.s32.totalorder %s71, %s73
      %p77 = scmp.eq.s32.totalorder %s16, 0
      %p78 = por %p76, %p77
      %p79 = scmp.ne.s32.totalorder %s71, %s73
      %p80 = scmp.eq.s32.totalorder %s21, 1
      %p81 = por %p79, %p80
      %p82 = scmp.ne.s32.totalorder %s73, %s74
      %p83 = scmp.eq.s32.totalorder %s21, 0
      %p84 = por %p82, %p83
      %p85 = scmp.ne.s32.totalorder %s73, %s74
      %p86 = scmp.eq.s32.totalorder %s22, 1
      %p87 = por %p85, %p86
      %p89 = scmp.ne.s32.totalorder %s74, %s88
      %p90 = scmp.eq.s32.totalorder %s22, 0
      %p91 = por %p89, %p90
      %s92 = ssub.s32 %s16, %s23
      %p93 = scmp.eq.s32.totalorder %s92, 0
      %s95 = sadd.s32 %s94, 1
      %s96 = scalar_select %p93, %s94, %s95
      %p99 = pneg %p93
      %p100 = scmp.eq.s32.totalorder %s16, 1
      %p101 = por %p99, %p100
      %p102 = scmp.ne.s32.totalorder %s94, %s97
      %p103 = scmp.eq.s32.totalorder %s16, 0
      %p104 = por %p102, %p103
      %p105 = scmp.ne.s32.totalorder %s94, %s97
      %p106 = scmp.eq.s32.totalorder %s21, 1
      %p107 = por %p105, %p106
      %p108 = scmp.ne.s32.totalorder %s97, %s98
      %p109 = scmp.eq.s32.totalorder %s21, 0
      %p110 = por %p108, %p109
      %p111 = scmp.ne.s32.totalorder %s97, %s98
      %p112 = scmp.eq.s32.totalorder %s22, 1
      %p113 = por %p111, %p112
      %p115 = scmp.ne.s32.totalorder %s98, %s114
      %p116 = scmp.eq.s32.totalorder %s22, 0
      %p117 = por %p115, %p116
      %p118 = scmp.le.s32.totalorder 1, %s16
      %p119 = scmp.lt.s32.totalorder %s16, 3
      %p120 = pnand %p118, %p119
      %p121 = pneg %p120
      // Predicated region
      $region9: #{tpu_custom_call.1} parent=5 // pred_check
        _
      $region10: #{tpu_custom_call.1} parent=5 // pred_check_branch
        %123 = sbr.rel (%p120) target = $region12
      $region11: #{tpu_custom_call.1} parent=5 // pred_region
        %s124 = ssub.s32 %s16, 1
        // Predicated region
        $region13: #{tpu_custom_call.1} parent=11 // pred_check
          %p125 = pneg %p63
        $region14: #{tpu_custom_call.1} parent=11 // pred_check_branch
          %127 = sbr.rel (%p125) target = $region16
        $region15: #{tpu_custom_call.1} parent=11 // pred_region
          %129 = vsyncadd [#allocation7], 0
          %s131 = sshll.u32 %s1, 4
          %s132 = int_to_ptr.hbm [resolvable:$true] %s131
          %s133 = sshll.u32 [#allocation6], 4
          %s134 = int_to_ptr.vmem [resolvable:$true] %s133
          %136 = dma.hbm_to_vmem [thread:$0]  %s132, 64, %s134, [#allocation7]
        $region16: #{tpu_custom_call.1} parent=11 // pred_fallthru
          _
        // Predicated region
        $region17: #{tpu_custom_call.1} parent=11 // pred_check
          %p137 = pneg %p84
        $region18: #{tpu_custom_call.1} parent=11 // pred_check_branch
          %139 = sbr.rel (%p137) target = $region20
        $region19: #{tpu_custom_call.1} parent=11 // pred_region
          %141 = vsyncadd [#allocation7], 0
          %s142 = sshll.u32 %s2, 4
          %s143 = int_to_ptr.hbm [resolvable:$true] %s142
          %s144 = sshll.u32 [#allocation8], 4
          %s145 = int_to_ptr.vmem [resolvable:$true] %s144
          %150 = dma.hbm_to_vmem [thread:$0]  %s143, 288, %s145, [#allocation7], 32, 32, 2
        $region20: #{tpu_custom_call.1} parent=11 // pred_fallthru
          _
      $region12: #{tpu_custom_call.1} parent=5 // pred_fallthru
        _
      %p151 = scmp.lt.s32.totalorder %s16, 2
      // Predicated region
      $region21: #{tpu_custom_call.1} parent=5 // pred_check
        %p152 = pneg %p151
      $region22: #{tpu_custom_call.1} parent=5 // pred_check_branch
        %154 = sbr.rel (%p152) target = $region24
      $region23: #{tpu_custom_call.1} parent=5 // pred_region
        // Predicated region
        $region25: #{tpu_custom_call.1} parent=23 // pred_check
          %p155 = pneg %p36
        $region26: #{tpu_custom_call.1} parent=23 // pred_check_branch
          %157 = sbr.rel (%p155) target = $region28
        $region27: #{tpu_custom_call.1} parent=23 // pred_region
          %s158 = sand.u32 %s26, 1
          %s159 = scalar_lea.sflag [#allocation4], %s158
          %s160 = sand.u32 %s26, 1
          %s161 = smul.addr %s160, 16
          %s162 = scalar_lea.vmem [#allocation3], %s161
          %164 = vsyncadd %s159, 0
          %s165 = smul.addr %s16, 2
          %s166 = smul.addr %s165, 8
          %s167 = scalar_lea.hbm %s0, %s166
          %s169 = sshll.u32 %s167, 4
          %s170 = int_to_ptr.hbm [resolvable:$true] %s169
          %s171 = sshll.u32 %s162, 4
          %s172 = int_to_ptr.vmem [resolvable:$true] %s171
          %174 = dma.hbm_to_vmem [thread:$0]  %s170, 256, %s172, %s159
        $region28: #{tpu_custom_call.1} parent=23 // pred_fallthru
          _
      $region24: #{tpu_custom_call.1} parent=5 // pred_fallthru
        _
      %p175 = scmp.le.s32.totalorder 1, %s16
      %p176 = scmp.lt.s32.totalorder %s16, 3
      %p177 = pnand %p175, %p176
      %p178 = pneg %p177
      // Predicated region
      $region29: #{tpu_custom_call.1} parent=5 // pred_check
        _
      $region30: #{tpu_custom_call.1} parent=5 // pred_check_branch
        %180 = sbr.rel (%p177) target = $region32
      $region31: #{tpu_custom_call.1} parent=5 // pred_region
        %s181 = ssub.s32 %s16, 1
        %s182 = sand.u32 %s29, 1
        %s183 = scalar_lea.sflag [#allocation4], %s182
        %s184 = sand.u32 %s29, 1
        %s185 = smul.addr %s184, 16
        %s186 = scalar_lea.vmem [#allocation3], %s185
        // Predicated region
        $region33: #{tpu_custom_call.1} parent=31 // pred_check
          %p187 = pneg %p42
        $region34: #{tpu_custom_call.1} parent=31 // pred_check_branch
          %189 = sbr.rel (%p187) target = $region36
        $region35: #{tpu_custom_call.1} parent=31 // pred_region
          %191 = dma.done %s183, 256
        $region36: #{tpu_custom_call.1} parent=31 // pred_fallthru
          _
        // Predicated region
        $region37: #{tpu_custom_call.1} parent=31 // pred_check
          %p192 = pneg %p63
        $region38: #{tpu_custom_call.1} parent=31 // pred_check_branch
          %194 = sbr.rel (%p192) target = $region40
        $region39: #{tpu_custom_call.1} parent=31 // pred_region
          %196 = dma.done [#allocation7], 64
        $region40: #{tpu_custom_call.1} parent=31 // pred_fallthru
          _
        // Predicated region
        $region41: #{tpu_custom_call.1} parent=31 // pred_check
          %p197 = pneg %p84
        $region42: #{tpu_custom_call.1} parent=31 // pred_check_branch
          %199 = sbr.rel (%p197) target = $region44
        $region43: #{tpu_custom_call.1} parent=31 // pred_region
          %201 = dma.done [#allocation7], 288
        $region44: #{tpu_custom_call.1} parent=31 // pred_fallthru
          _
        %s202 = sand.u32 %s29, 1
        %s203 = scalar_lea.sflag [#allocation4], %s202
        %s204 = sand.u32 %s29, 1
        %s205 = smul.addr %s204, 16
        %s206 = scalar_lea.vmem [#allocation3], %s205
        %p207 = pneg %p42
        %p208 = pneg %p39
        %p209 = pneg %p63
        %p210 = pneg %p60
        %p211 = pneg %p84
        %p212 = pneg %p81
        %p213 = pneg %p110
        %p214 = pneg %p107
        %s215 = sand.u32 %s97, 1
        %s216 = scalar_lea.sflag [#allocation5], %s215
        %s217 = sand.u32 %s97, 1
        %s218 = smul.addr %s217, 8
        %s219 = scalar_lea.vmem [#allocation9], %s218
        %v220 = vld [vmem:[%s186] sm:$0xff]
        %v221 = vld [vmem:[%s186 + $0x8] sm:$0xff]
        %222 = vrot.lane.b32.xlu0 %v220, 17
        %v223 = vpop.permute.xlu0 %222
        %224 = vrot.lane.b32.xlu0 %v221, 17
        %v225 = vpop.permute.xlu0 %224
        %v226 = vlaneseq
        %v227 = vand.u32 %v226, 127
        %vm228 = vcmp.lt.s32.totalorder %v227, 17
        %v229 = vsel %vm228, %v223, %v225
        %v230 = vsel %vm228, %v225, %v223
        %v231 = vld [vmem:[#allocation8] sm:$0x3]
        %v233 = vperm.slane %v231, 0
        %v234 = vperm.slane %v231, 1
        %v237 = vmul.f32 %v230, %v233
        %v238 = vmul.f32 %v229, %v234
        %239 = vst [vmem:[#allocation2] sm:$0xff] %v237
        %240 = vst [vmem:[#allocation2 + $0x8] sm:$0xff] %v238
        %241 = vrot.lane.b32.xlu0 %v220, 16
        %v242 = vpop.permute.xlu0 %241
        %243 = vrot.lane.b32.xlu0 %v221, 16
        %v244 = vpop.permute.xlu0 %243
        %vm245 = vcmp.lt.s32.totalorder %v227, 16
        %v246 = vsel %vm245, %v242, %v244
        %v247 = vsel %vm245, %v244, %v242
        %s248 = scalar_lea.vmem [#allocation8], 2
        %v249 = vld [vmem:[%s248] sm:$0x3]
        %v251 = vperm.slane %v249, 0
        %v252 = vperm.slane %v249, 1
        %v255 = vmul.f32 %v247, %v251
        %v256 = vmul.f32 %v246, %v252
        %257 = vst [vmem:[#allocation2 + $0x10] sm:$0xff] %v255
        %258 = vst [vmem:[#allocation2 + $0x18] sm:$0xff] %v256
        %259 = vrot.lane.b32.xlu0 %v220, 15
        %v260 = vpop.permute.xlu0 %259
        %261 = vrot.lane.b32.xlu0 %v221, 15
        %v262 = vpop.permute.xlu0 %261
        %vm263 = vcmp.lt.s32.totalorder %v227, 15
        %v264 = vsel %vm263, %v260, %v262
        %v265 = vsel %vm263, %v262, %v260
        %s266 = scalar_lea.vmem [#allocation8], 4
        %v267 = vld [vmem:[%s266] sm:$0x3]
        %v269 = vperm.slane %v267, 0
        %v270 = vperm.slane %v267, 1
        %v273 = vmul.f32 %v265, %v269
        %v274 = vmul.f32 %v264, %v270
        %275 = vst [vmem:[#allocation2 + $0x20] sm:$0xff] %v273
        %276 = vst [vmem:[#allocation2 + $0x28] sm:$0xff] %v274
        %277 = vrot.lane.b32.xlu0 %v220, 1
        %v278 = vpop.permute.xlu0 %277
        %279 = vrot.lane.b32.xlu0 %v221, 1
        %v280 = vpop.permute.xlu0 %279
        %vm281 = vcmp.lt.s32.totalorder %v227, 1
        %v282 = vsel %vm281, %v278, %v280
        %v283 = vsel %vm281, %v280, %v278
        %s284 = scalar_lea.vmem [#allocation8], 6
        %v285 = vld [vmem:[%s284] sm:$0x3]
        %v287 = vperm.slane %v285, 0
        %v288 = vperm.slane %v285, 1
        %v291 = vmul.f32 %v283, %v287
        %v292 = vmul.f32 %v282, %v288
        %293 = vst [vmem:[#allocation2 + $0x30] sm:$0xff] %v291
        %294 = vst [vmem:[#allocation2 + $0x38] sm:$0xff] %v292
        %295 = vst [vmem:[#allocation2 + $0x40] sm:$0xff] %v220
        %296 = vst [vmem:[#allocation2 + $0x48] sm:$0xff] %v221
        %297 = vrot.lane.b32.xlu0 %v220, 127
        %v298 = vpop.permute.xlu0 %297
        %299 = vrot.lane.b32.xlu0 %v221, 127
        %v300 = vpop.permute.xlu0 %299
        %vm301 = vcmp.lt.s32.totalorder %v227, 127
        %v302 = vsel %vm301, %v298, %v300
        %v303 = vsel %vm301, %v300, %v298
        %s304 = scalar_lea.vmem [#allocation8], 10
        %v305 = vld [vmem:[%s304] sm:$0x3]
        %v307 = vperm.slane %v305, 0
        %v308 = vperm.slane %v305, 1
        %v311 = vmul.f32 %v302, %v307
        %v312 = vmul.f32 %v303, %v308
        %313 = vst [vmem:[#allocation2 + $0x50] sm:$0xff] %v311
        %314 = vst [vmem:[#allocation2 + $0x58] sm:$0xff] %v312
        %315 = vrot.lane.b32.xlu0 %v220, 113
        %v316 = vpop.permute.xlu0 %315
        %317 = vrot.lane.b32.xlu0 %v221, 113
        %v318 = vpop.permute.xlu0 %317
        %vm319 = vcmp.lt.s32.totalorder %v227, 113
        %v320 = vsel %vm319, %v316, %v318
        %v321 = vsel %vm319, %v318, %v316
        %s322 = scalar_lea.vmem [#allocation8], 12
        %v323 = vld [vmem:[%s322] sm:$0x3]
        %v325 = vperm.slane %v323, 0
        %v326 = vperm.slane %v323, 1
        %v329 = vmul.f32 %v320, %v325
        %v330 = vmul.f32 %v321, %v326
        %331 = vst [vmem:[#allocation2 + $0x60] sm:$0xff] %v329
        %332 = vst [vmem:[#allocation2 + $0x68] sm:$0xff] %v330
        %333 = vrot.lane.b32.xlu0 %v220, 112
        %v334 = vpop.permute.xlu0 %333
        %335 = vrot.lane.b32.xlu0 %v221, 112
        %v336 = vpop.permute.xlu0 %335
        %vm337 = vcmp.lt.s32.totalorder %v227, 112
        %v338 = vsel %vm337, %v334, %v336
        %v339 = vsel %vm337, %v336, %v334
        %s340 = scalar_lea.vmem [#allocation8], 14
        %v341 = vld [vmem:[%s340] sm:$0x3]
        %v343 = vperm.slane %v341, 0
        %v344 = vperm.slane %v341, 1
        %v347 = vmul.f32 %v338, %v343
        %v348 = vmul.f32 %v339, %v344
        %349 = vst [vmem:[#allocation2 + $0x70] sm:$0xff] %v347
        %350 = vst [vmem:[#allocation2 + $0x78] sm:$0xff] %v348
        %351 = vrot.lane.b32.xlu0 %v220, 111
        %v352 = vpop.permute.xlu0 %351
        %353 = vrot.lane.b32.xlu0 %v221, 111
        %v354 = vpop.permute.xlu0 %353
        %vm355 = vcmp.lt.s32.totalorder %v227, 111
        %v356 = vsel %vm355, %v352, %v354
        %v357 = vsel %vm355, %v354, %v352
        %s358 = scalar_lea.vmem [#allocation8], 16
        %v359 = vld [vmem:[%s358] sm:$0x3]
        %v361 = vperm.slane %v359, 0
        %v362 = vperm.slane %v359, 1
        %v365 = vmul.f32 %v356, %v361
        %v366 = vmul.f32 %v357, %v362
        %367 = vst [vmem:[#allocation2 + $0x80] sm:$0xff] %v365
        %368 = vst [vmem:[#allocation2 + $0x88] sm:$0xff] %v366
        %v369 = vlaneseq
        %vm370 = vcmp.ge.s32.totalorder %v369, 0
        %vm371 = vcmp.lt.s32.totalorder %v369, 256
        %vm372 = vmand %vm370, %vm371
        %s373 = scalar_lea.vmem [#allocation2], 144
        %374 = vst.msk [vmem:[%s373] ss:$8 sm:$0x3] %vm372, 1.0
        %375 = vst.msk [vmem:[%s373] ss:$8 sm:$0x0] %vm372, 1.0
        %v376 = vld [vmem:[#allocation6] sm:$0xf]
        %v377 = vld [vmem:[#allocation2] sm:$0xff]
        %v378 = vld [vmem:[#allocation2 + $0x8] sm:$0xff]
        %v379 = vld [vmem:[#allocation2 + $0x10] sm:$0xff]
        %v380 = vld [vmem:[#allocation2 + $0x18] sm:$0xff]
        %v381 = vld [vmem:[#allocation2 + $0x20] sm:$0xff]
        %v382 = vld [vmem:[#allocation2 + $0x28] sm:$0xff]
        %v383 = vld [vmem:[#allocation2 + $0x30] sm:$0xff]
        %v384 = vld [vmem:[#allocation2 + $0x38] sm:$0xff]
        %v385 = vld [vmem:[#allocation2 + $0x40] sm:$0xff]
        %v386 = vld [vmem:[#allocation2 + $0x48] sm:$0xff]
        %v387 = vld [vmem:[#allocation2 + $0x50] sm:$0xff]
        %v388 = vld [vmem:[#allocation2 + $0x58] sm:$0xff]
        %v389 = vld [vmem:[#allocation2 + $0x60] sm:$0xff]
        %v390 = vld [vmem:[#allocation2 + $0x68] sm:$0xff]
        %v391 = vld [vmem:[#allocation2 + $0x70] sm:$0xff]
        %v392 = vld [vmem:[#allocation2 + $0x78] sm:$0xff]
        %v393 = vld [vmem:[#allocation2 + $0x80] sm:$0xff]
        %v394 = vld [vmem:[#allocation2 + $0x88] sm:$0xff]
        %v395 = vld [vmem:[#allocation2 + $0x90] sm:$0x1]
        %v396 = vld [vmem:[#allocation2 + $0x98] sm:$0x1]
        %vm397 = vcmask 596992
        %v399 = vsel %vm397, %v376, 0
        %vm401 = vcmask 1040384
        %v403 = vsel %vm401, %v395, 0
        %v406 = vsel %vm401, %v396, 0
        %408 = vmatpush.msra.mxu0 0.0
        %409 = vmatpush.msra.mxu0 0.0
        %410 = vmatpush.msra.mxu0 0.0
        %411 = vmatpush.msra.mxu0 0.0
        %412 = vmatpush.msra.mxu0 0.0
        %413 = vmatpush.msra.mxu0 0.0
        %414 = vmatpush.msra.mxu0 %v403
        %415 = vmatpush.msra.mxu0 %v393
        %416 = vmatpush.msra.mxu0 %v391
        %417 = vmatpush.msra.mxu0 %v389
        %418 = vmatpush.msra.mxu0 %v387
        %419 = vmatpush.msra.mxu0 %v385
        %420 = vmatpush.msra.mxu0 %v383
        %421 = vmatpush.msra.mxu0 %v381
        %422 = vmatpush.msra.mxu0 %v379
        %423 = vmatpush.msra.mxu0 %v377
        %424 = vmatmul.f32.gmra.mxu0 %v399
        %v425 = vpop.f32.mrf.mxu0
        %v426 = vadd.f32 0.0, %v425
        %427 = vdwg.mxu0
        %428 = vmatpush.msra.mxu0 0.0
        %429 = vmatpush.msra.mxu0 0.0
        %430 = vmatpush.msra.mxu0 0.0
        %431 = vmatpush.msra.mxu0 0.0
        %432 = vmatpush.msra.mxu0 0.0
        %433 = vmatpush.msra.mxu0 0.0
        %434 = vmatpush.msra.mxu0 %v406
        %435 = vmatpush.msra.mxu0 %v394
        %436 = vmatpush.msra.mxu0 %v392
        %437 = vmatpush.msra.mxu0 %v390
        %438 = vmatpush.msra.mxu0 %v388
        %439 = vmatpush.msra.mxu0 %v386
        %440 = vmatpush.msra.mxu0 %v384
        %441 = vmatpush.msra.mxu0 %v382
        %442 = vmatpush.msra.mxu0 %v380
        %443 = vmatpush.msra.mxu0 %v378
        %444 = vmatmul.f32.gmra.mxu0 %v399
        %v445 = vpop.f32.mrf.mxu0
        %v446 = vadd.f32 0.0, %v445
        %447 = vdwg.mxu0
        %v450 = vrot.slane %v446, 4
        %vm451 = vcmask 1043456
        %v452 = vsel %vm451, %v426, %v450
        %454 = vst [vmem:[%s219] sm:$0xff] %v452
        %s455 = sand.u32 %s97, 1
        %s456 = scalar_lea.sflag [#allocation5], %s455
        %s457 = sand.u32 %s97, 1
        %s458 = smul.addr %s457, 8
        %s459 = scalar_lea.vmem [#allocation9], %s458
        // Predicated region
        $region45: #{tpu_custom_call.1} parent=31 // pred_check
          %p460 = pneg %p107
        $region46: #{tpu_custom_call.1} parent=31 // pred_check_branch
          %462 = sbr.rel (%p460) target = $region48
        $region47: #{tpu_custom_call.1} parent=31 // pred_region
          %464 = vsyncadd %s456, 0
          %s465 = smul.addr %s21, 2
          %s466 = smul.addr %s465, 4
          %s467 = scalar_lea.hbm %s3, %s466
          %s469 = sshll.u32 %s459, 4
          %s470 = int_to_ptr.vmem [resolvable:$true] %s469
          %s471 = sshll.u32 %s467, 4
          %s472 = int_to_ptr.hbm [resolvable:$true] %s471
          %474 = dma.vmem_to_hbm [thread:$0]  %s470, 128, %s472, %s456
        $region48: #{tpu_custom_call.1} parent=31 // pred_fallthru
          _
      $region32: #{tpu_custom_call.1} parent=5 // pred_fallthru
        _
      %p475 = scmp.le.s32.totalorder 2, %s16
      // Predicated region
      $region49: #{tpu_custom_call.1} parent=5 // pred_check
        %p476 = pneg %p475
      $region50: #{tpu_custom_call.1} parent=5 // pred_check_branch
        %478 = sbr.rel (%p476) target = $region52
      $region51: #{tpu_custom_call.1} parent=5 // pred_region
        %s479 = ssub.s32 %s16, 2
        // Predicated region
        $region53: #{tpu_custom_call.1} parent=51 // pred_check
          %p480 = pneg %p113
        $region54: #{tpu_custom_call.1} parent=51 // pred_check_branch
          %482 = sbr.rel (%p480) target = $region56
        $region55: #{tpu_custom_call.1} parent=51 // pred_region
          %s483 = sand.u32 %s98, 1
          %s484 = scalar_lea.sflag [#allocation5], %s483
          %s485 = sand.u32 %s98, 1
          %s486 = smul.addr %s485, 8
          %s487 = scalar_lea.vmem [#allocation9], %s486
          %489 = dma.done %s484, 128
        $region56: #{tpu_custom_call.1} parent=51 // pred_fallthru
          _
      $region52: #{tpu_custom_call.1} parent=5 // pred_fallthru
        _
    $region6: #{tpu_custom_call.1} parent=1 // loop_footer
      %s20 = sadd.s32 1, %s16
    $region7: #{tpu_custom_call.1} parent=1 // loop_footer_branch
      %15 = sbr.rel target = $region3
    $region8: #{tpu_custom_call.1} parent=1 // loop_exit
      _
    %490 = vsyncpa [#allocation4], 1
    %s491 = scalar_lea.sflag [#allocation4], 1
    %492 = vsyncpa %s491, 1
    %493 = vsyncpa [#allocation7], 1
    %494 = vsyncpa [#allocation5], 1
    %s495 = scalar_lea.sflag [#allocation5], 1
    %496 = vsyncpa %s495, 1

</llo_original>
